<compile_context>
chip_gen: v6e
topology: v6e:2x2x1
jax: 0.10.0
libtpu: 0.0.40
codegen_flags: <defaults>
</compile_context>

<pallas_src>
import math
import functools

import jax
import jax.numpy as jnp
from jax.experimental import pallas as pl
from jax.experimental.pallas import tpu as pltpu


def _softclamp_kernel(x_ref, o_ref, *, min_val, max_val, boundary,
                      logsigmoid_offset, softplus_offset):
    x = x_ref[...].astype(jnp.float32)

    large = x > (max_val - boundary)
    small = x < (min_val + boundary)

    # logsigmoid(y) = -softplus(-y)  =>  select the argument, one softplus.
    #   large: max + logsigmoid(x - logsigmoid_offset) = max - softplus(logsigmoid_offset - x)
    #   small: min + softplus(x - softplus_offset)
    arg = jnp.where(large, logsigmoid_offset - x, x - softplus_offset)
    # numerically stable softplus
    sp = jnp.maximum(arg, 0.0) + jnp.log1p(jnp.exp(-jnp.abs(arg)))

    out = jnp.where(large, max_val - sp, jnp.where(small, min_val + sp, x))
    o_ref[...] = out.astype(o_ref.dtype)


def softclamp_pallas(x, min_val: float, max_val: float, boundary: float = 1e-5):
    assert max_val > min_val
    if boundary is not None:
        assert 0.0 < boundary <= (max_val - min_val) / 2.0
    else:
        boundary = 1e-5

    logsigmoid_offset = max_val + math.log(1.0 - math.exp(-boundary))
    softplus_offset = min_val - math.log(1.0 - math.exp(-boundary))

    orig_shape = x.shape
    orig_dtype = x.dtype

    flat = x.reshape(-1)
    n = flat.shape[0]

    # Pick the widest lane extent that divides n exactly -> no pad in the
    # common case. Fall back to W=128 + pad only for truly ragged sizes.
    width = None
    for w in (1024, 512, 256, 128):
        if n % w == 0:
            width = w
            break
    padded = False
    if width is None:
        width = 128
        n_pad = pl.cdiv(n, width) * width
        flat = jnp.pad(flat, (0, n_pad - n))
        padded = True

    x2d = flat.reshape(-1, width)
    rows = x2d.shape[0]

    # ~2 MiB per block buffer; with double-buffered input + output this stays
    # inside v5e's 16 MiB scoped-VMEM default and v7x's 32 MiB default.
    dtype_bytes = jnp.dtype(orig_dtype).itemsize
    target_block_bytes = 2 * 1024 * 1024
    row_block = max(8, target_block_bytes // (width * dtype_bytes))
    row_block = (row_block // 8) * 8
    if row_block >= rows:
        row_block = rows                 # full-extent block (may be < 8: allowed)
        grid = (1,)
    else:
        grid = (pl.cdiv(rows, row_block),)   # ragged last block masked by Pallas

    kernel = functools.partial(
        _softclamp_kernel,
        min_val=float(min_val),
        max_val=float(max_val),
        boundary=float(boundary),
        logsigmoid_offset=float(logsigmoid_offset),
        softplus_offset=float(softplus_offset),
    )

    cost = pl.CostEstimate(
        flops=10 * n,                    # cmp/select/add/abs/neg per element
        transcendentals=2 * n,           # 1 exp + 1 log1p per element
        bytes_accessed=2 * n * dtype_bytes,
    )

    out2d = pl.pallas_call(
        kernel,
        out_shape=jax.ShapeDtypeStruct((rows, width), orig_dtype),
        grid_spec=pltpu.PrefetchScalarGridSpec(
            num_scalar_prefetch=0,
            grid=grid,
            in_specs=[pl.BlockSpec((row_block, width), lambda i: (i, 0))],
            out_specs=pl.BlockSpec((row_block, width), lambda i: (i, 0)),
        ),
        compiler_params=pltpu.CompilerParams(
            dimension_semantics=("parallel",)),
        cost_estimate=cost,
    )(x2d)

    out_flat = out2d.reshape(-1)
    if padded:
        out_flat = out_flat[:n]
    return out_flat.reshape(orig_shape)


class SoftclampPallas:
    """Mirror of the PyTorch Softclamp module."""

    def __init__(self, min: float, max: float, boundary: float = 1e-5):
        self.min = min
        self.max = max
        self.boundary = boundary

    def __call__(self, x):
        return softclamp_pallas(x, self.min, self.max, self.boundary)


def _softclamp_ref(x, min_val, max_val, boundary=1e-5):
    # Pure-JAX reference mirroring the PyTorch semantics.
    logsigmoid_offset = max_val + math.log(1.0 - math.exp(-boundary))
    softplus_offset = min_val - math.log(1.0 - math.exp(-boundary))
    large = x > (max_val - boundary)
    small = x < (min_val + boundary)
    large_val = max_val + jax.nn.log_sigmoid(x - logsigmoid_offset)
    small_val = min_val + jax.nn.softplus(x - softplus_offset)
    return jnp.where(large, large_val, jnp.where(small, small_val, x))


if __name__ == "__main__":
    key = jax.random.PRNGKey(0)
    module = SoftclampPallas(min=-1.0, max=1.0, boundary=0.25)

    # Main test: NCHW input like the PyTorch module would see (no-pad path).
    x = jax.random.normal(key, (2, 4, 16, 16), dtype=jnp.float32) * 3.0
    out = jax.block_until_ready(module(x))
    ref = _softclamp_ref(x, -1.0, 1.0, 0.25)
    assert out.shape == x.shape and out.dtype == x.dtype
    assert jnp.allclose(out, ref, atol=1e-5, rtol=1e-5)

    # Ragged-size test: exercises the pad fallback path.
    x2 = jax.random.normal(jax.random.PRNGKey(1), (3, 5, 7), dtype=jnp.float32) * 3.0
    out2 = jax.block_until_ready(module(x2))
    ref2 = _softclamp_ref(x2, -1.0, 1.0, 0.25)
    assert out2.shape == x2.shape and out2.dtype == x2.dtype
    assert jnp.allclose(out2, ref2, atol=1e-5, rtol=1e-5)

    print("KERNEL_OK")
</pallas_src>

<mosaic_0001>
module attributes {stable_mosaic.version = 11 : i64} {
  func.func @_softclamp_kernel(%arg0: i32, %arg1: memref<2x1024xf32, #tpu.memory_space<vmem>>, %arg2: memref<2x1024xf32, #tpu.memory_space<vmem>>) attributes {dimension_semantics = [#tpu.dimension_semantics<parallel>], iteration_bounds = array<i64: 1>, scalar_prefetch = 0 : i64, scratch_operands = 0 : i64, tpu.core_type = #tpu.core_type<tc>, window_params = [{transform_indices = @transform_0, window_bounds = array<i64: 2, 1024>}, {transform_indices = @transform_1, window_bounds = array<i64: 2, 1024>}]} {
    %c0 = arith.constant 0 : index
    %c0_0 = arith.constant 0 : index
    %0 = vector.load %arg1[%c0, %c0_0] : memref<2x1024xf32, #tpu.memory_space<vmem>>, vector<2x1024xf32>
    %cst = arith.constant 7.500000e-01 : f32
    %1 = vector.broadcast %cst : f32 to vector<2x1024xf32>
    %2 = arith.cmpf ogt, %0, %1 : vector<2x1024xf32>
    %cst_1 = arith.constant -7.500000e-01 : f32
    %3 = vector.broadcast %cst_1 : f32 to vector<2x1024xf32>
    %4 = arith.cmpf olt, %0, %3 : vector<2x1024xf32>
    %cst_2 = arith.constant -0.508691549 : f32
    %5 = vector.broadcast %cst_2 : f32 to vector<2x1024xf32>
    %6 = arith.subf %5, %0 : vector<2x1024xf32>
    %cst_3 = arith.constant 0.508691549 : f32
    %7 = vector.broadcast %cst_3 : f32 to vector<2x1024xf32>
    %8 = arith.subf %0, %7 : vector<2x1024xf32>
    %9 = arith.select %2, %6, %8 : vector<2x1024xi1>, vector<2x1024xf32>
    %cst_4 = arith.constant 0.000000e+00 : f32
    %10 = vector.broadcast %cst_4 : f32 to vector<2x1024xf32>
    %11 = arith.maximumf %9, %10 : vector<2x1024xf32>
    %12 = math.absf %9 : vector<2x1024xf32>
    %cst_5 = arith.constant 0.000000e+00 : f32
    %13 = vector.broadcast %cst_5 : f32 to vector<2x1024xf32>
    %14 = arith.subf %13, %12 : vector<2x1024xf32>
    %15 = math.exp %14 : vector<2x1024xf32>
    %16 = math.log1p %15 : vector<2x1024xf32>
    %17 = arith.addf %11, %16 : vector<2x1024xf32>
    %cst_6 = arith.constant 1.000000e+00 : f32
    %18 = vector.broadcast %cst_6 : f32 to vector<2x1024xf32>
    %19 = arith.subf %18, %17 : vector<2x1024xf32>
    %cst_7 = arith.constant -1.000000e+00 : f32
    %20 = vector.broadcast %cst_7 : f32 to vector<2x1024xf32>
    %21 = arith.addf %20, %17 : vector<2x1024xf32>
    %22 = arith.select %4, %21, %0 : vector<2x1024xi1>, vector<2x1024xf32>
    %23 = arith.select %2, %19, %22 : vector<2x1024xi1>, vector<2x1024xf32>
    %c0_8 = arith.constant 0 : index
    %c0_9 = arith.constant 0 : index
    %24 = vector.load %arg2[%c0_8, %c0_9] : memref<2x1024xf32, #tpu.memory_space<vmem>>, vector<2x1024xf32>
    tpu.vector_store %arg2[%c0_8, %c0_9], %23 {strides = array<i32>} : memref<2x1024xf32, #tpu.memory_space<vmem>>, vector<2x1024xf32>,
    return
  }
  func.func @transform_0(%arg0: i32) -> (i32, i32) {
    %c0_i32 = arith.constant 0 : i32
    %c0_i32_0 = arith.constant 0 : i32
    return %arg0, %c0_i32 : i32, i32
  }
  func.func @transform_1(%arg0: i32) -> (i32, i32) {
    %c0_i32 = arith.constant 0 : i32
    %c0_i32_0 = arith.constant 0 : i32
    return %arg0, %c0_i32 : i32, i32
  }
}

</mosaic_0001>

<llo_original>
// kernel: tpu_custom_call.1
$region0: #{tpu_custom_call.1}
  #allocation0 [shape = 'u32[]', space=smem, size = 0x4, offset = 0x4, fixed_abs, tag = 'smem constant byte address 0x4 - core index']
  #allocation1 [shape = 'u32[144,128]{1,0:T(1,128)}', space=vmem, size = 0x12000, scoped, tag = 'internal scratch']
  %s0 = inlined_call_operand.hbm [shape: f32[2,1024], index: 0, kind: input, shape index: {}]
  %s1 = inlined_call_operand.hbm [shape: f32[2,1024], index: 1, kind: output, shape index: {}]
  %s2 = sld [smem:[#allocation0]]
  $region18: #{tpu_custom_call.1} parent=0
    _
  %s4 = ssub.s32 1, %s2
  %s5 = scalar_select 0, %s4, %s2
  $region1: #{tpu_custom_call.1} parent=0
    #allocation2 [shape = 'u8[8192]{0}', space=vmem, size = 0x2000, scoped, tag = 'input window, operand 0, single buffered']
    #allocation3 [shape = 's32[1]{0}', space=sflag, size = 0x4, scoped, tag = 'scoped memory for tpu_custom_call.1']
    #allocation4 [shape = 's32[1]{0}', space=sflag, size = 0x4, scoped, tag = 'scoped memory for tpu_custom_call.1']
    #allocation5 [shape = 'u8[8192]{0}', space=vmem, size = 0x2000, scoped, tag = 'output window, operand 0, single buffered']
    %6 = vsyncpa [#allocation3], 0
    %7 = vsyncpa [#allocation4], 0
    // Predicated region
    $region2: #{tpu_custom_call.1} parent=1 // pred_check
      _
    $region3: #{tpu_custom_call.1} parent=1 // pred_check_branch
      %9 = sbr.rel (0) target = $region5
    $region4: #{tpu_custom_call.1} parent=1 // pred_region
      %s11 = ssub.s32 256, 256
      %12 = vsyncadd [#allocation3], %s11
      %s14 = sshll.u32 [#allocation2], 4
      %s15 = int_to_ptr.vmem [resolvable:$true] %s14
      %17 = dma.hbm_to_vmem [thread:$0]  %s0, 256, %s15, [#allocation3]
    $region5: #{tpu_custom_call.1} parent=1 // pred_fallthru
      _
    // Predicated region
    $region6: #{tpu_custom_call.1} parent=1 // pred_check
      _
    $region7: #{tpu_custom_call.1} parent=1 // pred_check_branch
      %19 = sbr.rel (0) target = $region9
    $region8: #{tpu_custom_call.1} parent=1 // pred_region
      %20 = dma.done [#allocation3], 256
    $region9: #{tpu_custom_call.1} parent=1 // pred_fallthru
      _
    %v21 = vld [vmem:[#allocation2] sm:$0xff]
    %v22 = vld [vmem:[#allocation2 + $0x8] sm:$0xff]
    %vm23 = vcmp.gt.f32.partialorder %v21, 0.75
    %vm24 = vcmp.gt.f32.partialorder %v22, 0.75
    %vm25 = vcmp.lt.f32.partialorder %v21, -0.75
    %vm26 = vcmp.lt.f32.partialorder %v22, -0.75
    %v27 = vsub.f32 -0.50869155, %v21
    %v28 = vsub.f32 -0.50869155, %v22
    %v29 = vsub.f32 %v21, 0.50869155
    %v30 = vsub.f32 %v22, 0.50869155
    %v31 = vsel %vm23, %v27, %v29
    %v32 = vsel %vm24, %v28, %v30
    %v33 = vmax.f32 %v31, 0.0
    %v34 = vmax.f32 %v32, 0.0
    %v35 = vand.u32 2147483647, %v31
    %v36 = vand.u32 2147483647, %v32
    %v37 = vsub.f32 0.0, %v35
    %v38 = vsub.f32 0.0, %v36
    %v39 = vmul.f32 %v37, 1.442695
    %v40 = vpow.pop %v39
    %v41 = vmul.f32 %v38, 1.442695
    %v42 = vpow.pop %v41
    %v43 = vadd.f32 %v40, 1.0
    %v44 = vlog2.pop %v43
    %v45 = vmul.f32 %v44, 0.6931472
    %v46 = vmul.f32 -0.5, %v40
    %v47 = vadd.f32 %v46, 1.0
    %v48 = vmul.f32 %v47, %v40
    %v49 = vand.u32 2147483647, %v40
    %vm50 = vcmp.lt.f32.partialorder %v49, 0.0004427343
    %v51 = vsel %vm50, %v48, %v45
    %v52 = vadd.f32 %v42, 1.0
    %v53 = vlog2.pop %v52
    %v54 = vmul.f32 %v53, 0.6931472
    %v55 = vmul.f32 -0.5, %v42
    %v56 = vadd.f32 %v55, 1.0
    %v57 = vmul.f32 %v56, %v42
    %v58 = vand.u32 2147483647, %v42
    %vm59 = vcmp.lt.f32.partialorder %v58, 0.0004427343
    %v60 = vsel %vm59, %v57, %v54
    %v61 = vadd.f32 %v33, %v51
    %v62 = vadd.f32 %v34, %v60
    %v63 = vsub.f32 1.0, %v61
    %v64 = vsub.f32 1.0, %v62
    %v65 = vadd.f32 %v61, -1.0
    %v66 = vadd.f32 %v62, -1.0
    %v67 = vsel %vm25, %v65, %v21
    %v68 = vsel %vm26, %v66, %v22
    %v69 = vsel %vm23, %v63, %v67
    %v70 = vsel %vm24, %v64, %v68
    %71 = vst [vmem:[#allocation5] sm:$0xff] %v69
    %72 = vst [vmem:[#allocation5 + $0x8] sm:$0xff] %v70
    // Predicated region
    $region10: #{tpu_custom_call.1} parent=1 // pred_check
      _
    $region11: #{tpu_custom_call.1} parent=1 // pred_check_branch
      %74 = sbr.rel (0) target = $region13
    $region12: #{tpu_custom_call.1} parent=1 // pred_region
      %s76 = ssub.s32 256, 256
      %77 = vsyncadd [#allocation4], %s76
      %s79 = sshll.u32 [#allocation5], 4
      %s80 = int_to_ptr.vmem [resolvable:$true] %s79
      %82 = dma.vmem_to_hbm [thread:$0]  %s80, 256, %s1, [#allocation4]
    $region13: #{tpu_custom_call.1} parent=1 // pred_fallthru
      _
    // Predicated region
    $region14: #{tpu_custom_call.1} parent=1 // pred_check
      _
    $region15: #{tpu_custom_call.1} parent=1 // pred_check_branch
      %84 = sbr.rel (0) target = $region17
    $region16: #{tpu_custom_call.1} parent=1 // pred_region
      %85 = dma.done [#allocation4], 256
    $region17: #{tpu_custom_call.1} parent=1 // pred_fallthru
      _
    %86 = vsyncpa [#allocation3], 1
    %87 = vsyncpa [#allocation4], 1

</llo_original>
